<compile_context>
chip_gen: v5e
topology: v5e:2x2
jax: 0.10.0
libtpu: 0.0.40
codegen_flags: <defaults>
</compile_context>

<pallas_src>
import jax
import jax.numpy as jnp
from jax.experimental import pallas as pl
from jax.experimental.pallas import tpu as pltpu

# Original layer widths: encoder 784->128->64->12->3, decoder 3->12->64->128->784.
DIMS = [784, 128, 64, 12, 3, 12, 64, 128, 784]
N_LAYERS = len(DIMS) - 1               # 8 linear layers
ELU_LAYERS = (0, 1, 2, 4, 5, 6)        # ELU after every layer except 3 and 7

# Fused architecture after folding the activation-free 12->3 / 3->12 pair.
FUSED_DIMS = [784, 128, 64, 12, 12, 64, 128, 784]
N_FUSED = len(FUSED_DIMS) - 1          # 7 linear layers
FUSED_ELU = (0, 1, 2, 3, 4, 5)         # last (128->784) has no activation


def _round_up(x, m):
    return ((x + m - 1) // m) * m


def _elu(v):
    # nn.ELU(alpha=1.0): x if x > 0 else exp(x) - 1   (computed in f32)
    return jnp.where(v > 0, v, jnp.exp(jnp.minimum(v, 0.0)) - 1.0)


def ae_kernel(x_ref, *refs):
    """refs = (w0, b0, w1, b1, ..., w6, b6, out_ref) for the fused 7 layers."""
    out_ref = refs[-1]
    params = refs[:-1]
    compute_dtype = params[0].dtype            # f32 or bf16 (MXU input dtype)
    h = x_ref[...].astype(compute_dtype)       # cast in-kernel: no wrapper copy
    acc = None
    for i in range(N_FUSED):
        w = params[2 * i][...]                 # (in, out), compute_dtype
        b = params[2 * i + 1][...]             # (1, out),  f32
        acc = jnp.dot(h, w, preferred_element_type=jnp.float32) + b
        if i in FUSED_ELU:
            acc = _elu(acc)
        if i < N_FUSED - 1:
            h = acc.astype(compute_dtype)      # feed the next matmul its MXU dtype
    out_ref[...] = acc.astype(out_ref.dtype)


def prepare_params(params, compute_dtype=jnp.float32):
    """Fold layers 3 & 4 (no activation between 12->3 and 3->12) and pre-cast.

    Call ONCE outside the forward loop.  Returns 7 (W (in,out) compute_dtype,
    b (1,out) f32) pairs matching FUSED_DIMS.
    """
    assert len(params) == N_LAYERS
    w3, b3 = params[3]                         # (12, 3), (1, 3)
    w4, b4 = params[4]                         # (3, 12), (1, 12)
    w34 = jnp.dot(w3, w4, preferred_element_type=jnp.float32)        # (12, 12)
    b34 = jnp.dot(b3, w4, preferred_element_type=jnp.float32) + b4   # (1, 12)
    fused = list(params[:3]) + [(w34, b34)] + list(params[5:])
    return [(w.astype(compute_dtype), b.astype(jnp.float32)) for (w, b) in fused]


def autoencoder_forward(x, prepared_params, *, tm=None, out_dtype=None,
                        even_grid=False, vmem_limit_bytes=48 << 20):
    """x: (B, 784).  prepared_params: output of prepare_params().

    tm: batch tile (rows per grid step); default 1024 (f32) / 2048 (bf16).
    out_dtype: output dtype (default x.dtype; pass jnp.bfloat16 in bf16 mode to
               halve the dominant 784-wide HBM writeback).
    even_grid: set True on v7x so the parallel grid splits evenly over 2 TCs.
    """
    B, D_in = x.shape
    assert D_in == FUSED_DIMS[0]
    compute_dtype = prepared_params[0][0].dtype
    if out_dtype is None:
        out_dtype = x.dtype

    # --- Tile selection: biggest tile that fits, no artificial step minimum. ---
    cap = 2048 if compute_dtype == jnp.bfloat16 else 1024
    if tm is None:
        tm = cap
    tm = max(8, min(int(tm), cap))
    tm = min(tm, _round_up(B, 8))              # never tile past the batch
    grid_m = pl.cdiv(B, tm)
    if even_grid and grid_m > 1 and grid_m % 2 == 1:
        # Best-effort v7x megacore balance: shrink tm so the grid comes out even.
        tm = max(8, _round_up(pl.cdiv(B, grid_m + 1), 8))
        grid_m = pl.cdiv(B, tm)
    B_pad = grid_m * tm

    # Only pad when the batch is ragged w.r.t. the tile (no unconditional copies).
    xp = x if B_pad == B else jnp.pad(x, ((0, B_pad - B), (0, 0)))

    in_specs = [pl.BlockSpec((tm, FUSED_DIMS[0]), lambda i: (i, 0))]
    flat_args = [xp]
    for (w, b) in prepared_params:
        # Whole-array blocks with a constant index_map: DMA'd once, then
        # VMEM-resident for every grid step (total < 1 MB).
        in_specs.append(pl.BlockSpec(w.shape, lambda i: (0, 0)))
        in_specs.append(pl.BlockSpec(b.shape, lambda i: (0, 0)))
        flat_args.append(w)
        flat_args.append(b)

    # Advisory cost estimate for XLA's scheduler.
    flops = 2 * B_pad * sum(FUSED_DIMS[i] * FUSED_DIMS[i + 1]
                            for i in range(N_FUSED))
    transcendentals = B_pad * sum(FUSED_DIMS[i + 1] for i in FUSED_ELU)
    weight_bytes = sum(int(w.size) * w.dtype.itemsize + int(b.size) * 4
                       for (w, b) in prepared_params)
    bytes_accessed = (B_pad * FUSED_DIMS[0] * x.dtype.itemsize
                      + B_pad * FUSED_DIMS[-1] * jnp.dtype(out_dtype).itemsize
                      + weight_bytes)

    out = pl.pallas_call(
        ae_kernel,
        out_shape=jax.ShapeDtypeStruct((B_pad, FUSED_DIMS[-1]), out_dtype),
        grid_spec=pltpu.PrefetchScalarGridSpec(
            num_scalar_prefetch=0,
            grid=(grid_m,),
            in_specs=in_specs,
            out_specs=pl.BlockSpec((tm, FUSED_DIMS[-1]), lambda i: (i, 0)),
        ),
        compiler_params=pltpu.CompilerParams(
            dimension_semantics=("parallel",),
            vmem_limit_bytes=int(vmem_limit_bytes)),
        cost_estimate=pl.CostEstimate(
            flops=int(flops),
            transcendentals=int(transcendentals),
            bytes_accessed=int(bytes_accessed)),
    )(*flat_args)

    return out[:B] if B_pad != B else out


def init_params(key):
    """PyTorch nn.Linear default init: U[-k, k], k = 1/sqrt(fan_in)."""
    params = []
    for i in range(N_LAYERS):
        fan_in, fan_out = DIMS[i], DIMS[i + 1]
        key, kw, kb = jax.random.split(key, 3)
        bound = 1.0 / float(fan_in) ** 0.5
        w = jax.random.uniform(kw, (fan_in, fan_out), jnp.float32, -bound, bound)
        b = jax.random.uniform(kb, (1, fan_out), jnp.float32, -bound, bound)
        params.append((w, b))
    return params


def reference_unfused(x, params):
    """Original PyTorch module semantics (unfused 8 layers, f32)."""
    h = x
    for i, (w, b) in enumerate(params):
        h = jnp.dot(h, w, preferred_element_type=jnp.float32) + b
        if i in ELU_LAYERS:
            h = _elu(h)
    return h


def reference_fused(x, prepared_params):
    """Mirror of the kernel's exact casts (for checking the bf16 path)."""
    compute_dtype = prepared_params[0][0].dtype
    h = x.astype(compute_dtype)
    acc = None
    for i, (w, b) in enumerate(prepared_params):
        acc = jnp.dot(h, w, preferred_element_type=jnp.float32) + b
        if i in FUSED_ELU:
            acc = _elu(acc)
        if i < N_FUSED - 1:
            h = acc.astype(compute_dtype)
    return acc


if __name__ == "__main__":
    key = jax.random.PRNGKey(0)
    key, kx = jax.random.split(key)
    B = 8
    x = jax.random.normal(kx, (B, DIMS[0]), jnp.float32)
    params = init_params(key)

    # f32 compute path: checked against the ORIGINAL (unfused) module semantics.
    prep_f32 = prepare_params(params, jnp.float32)
    out = jax.block_until_ready(autoencoder_forward(x, prep_f32))
    ref = reference_unfused(x, params)
    assert out.shape == (B, DIMS[-1])
    assert jnp.allclose(out, ref, atol=1e-4, rtol=1e-4), "f32 mismatch vs reference"

    # bf16 matmul-input path with bf16 output (v6e/v7x perf config), checked
    # against a reference applying the same casts; accumulation is f32 in both.
    prep_bf16 = prepare_params(params, jnp.bfloat16)
    out_bf16 = jax.block_until_ready(
        autoencoder_forward(x, prep_bf16, out_dtype=jnp.bfloat16))
    ref_bf16 = reference_fused(x, prep_bf16)
    assert out_bf16.dtype == jnp.bfloat16
    assert jnp.allclose(out_bf16.astype(jnp.float32),
                        ref_bf16.astype(jnp.float32),
                        atol=3e-2, rtol=3e-2), "bf16 mismatch"

    # Ragged batch (cdiv + padding path) and the even-grid (v7x) knob.
    x37 = jax.random.normal(jax.random.PRNGKey(1), (37, DIMS[0]), jnp.float32)
    out37 = jax.block_until_ready(
        autoencoder_forward(x37, prep_f32, tm=16, even_grid=True))
    assert out37.shape == (37, DIMS[-1])
    assert jnp.allclose(out37, reference_unfused(x37, params),
                        atol=1e-4, rtol=1e-4), "odd-batch mismatch"

    print("KERNEL_OK")
</pallas_src>

<mosaic_0001>
module attributes {stable_mosaic.version = 11 : i64} {
  func.func @ae_kernel(%arg0: i32, %arg1: memref<8x784xf32, #tpu.memory_space<vmem>>, %arg2: memref<784x128xf32, #tpu.memory_space<vmem>>, %arg3: memref<1x128xf32, #tpu.memory_space<vmem>>, %arg4: memref<128x64xf32, #tpu.memory_space<vmem>>, %arg5: memref<1x64xf32, #tpu.memory_space<vmem>>, %arg6: memref<64x12xf32, #tpu.memory_space<vmem>>, %arg7: memref<1x12xf32, #tpu.memory_space<vmem>>, %arg8: memref<12x12xf32, #tpu.memory_space<vmem>>, %arg9: memref<1x12xf32, #tpu.memory_space<vmem>>, %arg10: memref<12x64xf32, #tpu.memory_space<vmem>>, %arg11: memref<1x64xf32, #tpu.memory_space<vmem>>, %arg12: memref<64x128xf32, #tpu.memory_space<vmem>>, %arg13: memref<1x128xf32, #tpu.memory_space<vmem>>, %arg14: memref<128x784xf32, #tpu.memory_space<vmem>>, %arg15: memref<1x784xf32, #tpu.memory_space<vmem>>, %arg16: memref<8x784xf32, #tpu.memory_space<vmem>>) attributes {dimension_semantics = [#tpu.dimension_semantics<parallel>], iteration_bounds = array<i64: 1>, scalar_prefetch = 0 : i64, scratch_operands = 0 : i64, tpu.core_type = #tpu.core_type<tc>, window_params = [{transform_indices = @transform_0, window_bounds = array<i64: 8, 784>}, {pipeline_mode = #tpu.pipeline_mode<synchronous>, transform_indices = @transform_1, window_bounds = array<i64: 784, 128>}, {pipeline_mode = #tpu.pipeline_mode<synchronous>, transform_indices = @transform_2, window_bounds = array<i64: 1, 128>}, {pipeline_mode = #tpu.pipeline_mode<synchronous>, transform_indices = @transform_3, window_bounds = array<i64: 128, 64>}, {pipeline_mode = #tpu.pipeline_mode<synchronous>, transform_indices = @transform_4, window_bounds = array<i64: 1, 64>}, {pipeline_mode = #tpu.pipeline_mode<synchronous>, transform_indices = @transform_5, window_bounds = array<i64: 64, 12>}, {pipeline_mode = #tpu.pipeline_mode<synchronous>, transform_indices = @transform_6, window_bounds = array<i64: 1, 12>}, {pipeline_mode = #tpu.pipeline_mode<synchronous>, transform_indices = @transform_7, window_bounds = array<i64: 12, 12>}, {pipeline_mode = #tpu.pipeline_mode<synchronous>, transform_indices = @transform_8, window_bounds = array<i64: 1, 12>}, {pipeline_mode = #tpu.pipeline_mode<synchronous>, transform_indices = @transform_9, window_bounds = array<i64: 12, 64>}, {pipeline_mode = #tpu.pipeline_mode<synchronous>, transform_indices = @transform_10, window_bounds = array<i64: 1, 64>}, {pipeline_mode = #tpu.pipeline_mode<synchronous>, transform_indices = @transform_11, window_bounds = array<i64: 64, 128>}, {pipeline_mode = #tpu.pipeline_mode<synchronous>, transform_indices = @transform_12, window_bounds = array<i64: 1, 128>}, {pipeline_mode = #tpu.pipeline_mode<synchronous>, transform_indices = @transform_13, window_bounds = array<i64: 128, 784>}, {pipeline_mode = #tpu.pipeline_mode<synchronous>, transform_indices = @transform_14, window_bounds = array<i64: 1, 784>}, {transform_indices = @transform_15, window_bounds = array<i64: 8, 784>}]} {
    %c0 = arith.constant 0 : index
    %c0_0 = arith.constant 0 : index
    %0 = vector.load %arg1[%c0, %c0_0] : memref<8x784xf32, #tpu.memory_space<vmem>>, vector<8x784xf32>
    %c0_1 = arith.constant 0 : index
    %c0_2 = arith.constant 0 : index
    %1 = vector.load %arg2[%c0_1, %c0_2] : memref<784x128xf32, #tpu.memory_space<vmem>>, vector<784x128xf32>
    %c0_3 = arith.constant 0 : index
    %c0_4 = arith.constant 0 : index
    %2 = vector.load %arg3[%c0_3, %c0_4] : memref<1x128xf32, #tpu.memory_space<vmem>>, vector<1x128xf32>
    %cst = arith.constant dense<0.000000e+00> : vector<8x128xf32>
    %3 = tpu.matmul %0, %1, %cst {dimension_numbers = #tpu.dot_dimension_numbers<[1], [0], [0], [1], [0, 0, 1, 1], [], []>} : vector<8x784xf32>, vector<784x128xf32>, vector<8x128xf32> -> vector<8x128xf32>
    %4 = vector.broadcast %2 : vector<1x128xf32> to vector<8x128xf32>
    %5 = arith.addf %3, %4 : vector<8x128xf32>
    %cst_5 = arith.constant 0.000000e+00 : f32
    %6 = vector.broadcast %cst_5 : f32 to vector<8x128xf32>
    %7 = arith.cmpf ogt, %5, %6 : vector<8x128xf32>
    %cst_6 = arith.constant 0.000000e+00 : f32
    %8 = vector.broadcast %cst_6 : f32 to vector<8x128xf32>
    %9 = arith.minimumf %5, %8 : vector<8x128xf32>
    %10 = math.exp %9 : vector<8x128xf32>
    %cst_7 = arith.constant 1.000000e+00 : f32
    %11 = vector.broadcast %cst_7 : f32 to vector<8x128xf32>
    %12 = arith.subf %10, %11 : vector<8x128xf32>
    %13 = arith.select %7, %5, %12 : vector<8x128xi1>, vector<8x128xf32>
    %c0_8 = arith.constant 0 : index
    %c0_9 = arith.constant 0 : index
    %14 = vector.load %arg4[%c0_8, %c0_9] : memref<128x64xf32, #tpu.memory_space<vmem>>, vector<128x64xf32>
    %c0_10 = arith.constant 0 : index
    %c0_11 = arith.constant 0 : index
    %15 = vector.load %arg5[%c0_10, %c0_11] : memref<1x64xf32, #tpu.memory_space<vmem>>, vector<1x64xf32>
    %cst_12 = arith.constant dense<0.000000e+00> : vector<8x64xf32>
    %16 = tpu.matmul %13, %14, %cst_12 {dimension_numbers = #tpu.dot_dimension_numbers<[1], [0], [0], [1], [0, 0, 1, 1], [], []>} : vector<8x128xf32>, vector<128x64xf32>, vector<8x64xf32> -> vector<8x64xf32>
    %17 = vector.broadcast %15 : vector<1x64xf32> to vector<8x64xf32>
    %18 = arith.addf %16, %17 : vector<8x64xf32>
    %cst_13 = arith.constant 0.000000e+00 : f32
    %19 = vector.broadcast %cst_13 : f32 to vector<8x64xf32>
    %20 = arith.cmpf ogt, %18, %19 : vector<8x64xf32>
    %cst_14 = arith.constant 0.000000e+00 : f32
    %21 = vector.broadcast %cst_14 : f32 to vector<8x64xf32>
    %22 = arith.minimumf %18, %21 : vector<8x64xf32>
    %23 = math.exp %22 : vector<8x64xf32>
    %cst_15 = arith.constant 1.000000e+00 : f32
    %24 = vector.broadcast %cst_15 : f32 to vector<8x64xf32>
    %25 = arith.subf %23, %24 : vector<8x64xf32>
    %26 = arith.select %20, %18, %25 : vector<8x64xi1>, vector<8x64xf32>
    %c0_16 = arith.constant 0 : index
    %c0_17 = arith.constant 0 : index
    %27 = vector.load %arg6[%c0_16, %c0_17] : memref<64x12xf32, #tpu.memory_space<vmem>>, vector<64x12xf32>
    %c0_18 = arith.constant 0 : index
    %c0_19 = arith.constant 0 : index
    %28 = vector.load %arg7[%c0_18, %c0_19] : memref<1x12xf32, #tpu.memory_space<vmem>>, vector<1x12xf32>
    %cst_20 = arith.constant dense<0.000000e+00> : vector<8x12xf32>
    %29 = tpu.matmul %26, %27, %cst_20 {dimension_numbers = #tpu.dot_dimension_numbers<[1], [0], [0], [1], [0, 0, 1, 1], [], []>} : vector<8x64xf32>, vector<64x12xf32>, vector<8x12xf32> -> vector<8x12xf32>
    %30 = vector.broadcast %28 : vector<1x12xf32> to vector<8x12xf32>
    %31 = arith.addf %29, %30 : vector<8x12xf32>
    %cst_21 = arith.constant 0.000000e+00 : f32
    %32 = vector.broadcast %cst_21 : f32 to vector<8x12xf32>
    %33 = arith.cmpf ogt, %31, %32 : vector<8x12xf32>
    %cst_22 = arith.constant 0.000000e+00 : f32
    %34 = vector.broadcast %cst_22 : f32 to vector<8x12xf32>
    %35 = arith.minimumf %31, %34 : vector<8x12xf32>
    %36 = math.exp %35 : vector<8x12xf32>
    %cst_23 = arith.constant 1.000000e+00 : f32
    %37 = vector.broadcast %cst_23 : f32 to vector<8x12xf32>
    %38 = arith.subf %36, %37 : vector<8x12xf32>
    %39 = arith.select %33, %31, %38 : vector<8x12xi1>, vector<8x12xf32>
    %c0_24 = arith.constant 0 : index
    %c0_25 = arith.constant 0 : index
    %40 = vector.load %arg8[%c0_24, %c0_25] : memref<12x12xf32, #tpu.memory_space<vmem>>, vector<12x12xf32>
    %c0_26 = arith.constant 0 : index
    %c0_27 = arith.constant 0 : index
    %41 = vector.load %arg9[%c0_26, %c0_27] : memref<1x12xf32, #tpu.memory_space<vmem>>, vector<1x12xf32>
    %cst_28 = arith.constant dense<0.000000e+00> : vector<8x12xf32>
    %42 = tpu.matmul %39, %40, %cst_28 {dimension_numbers = #tpu.dot_dimension_numbers<[1], [0], [0], [1], [0, 0, 1, 1], [], []>} : vector<8x12xf32>, vector<12x12xf32>, vector<8x12xf32> -> vector<8x12xf32>
    %43 = vector.broadcast %41 : vector<1x12xf32> to vector<8x12xf32>
    %44 = arith.addf %42, %43 : vector<8x12xf32>
    %cst_29 = arith.constant 0.000000e+00 : f32
    %45 = vector.broadcast %cst_29 : f32 to vector<8x12xf32>
    %46 = arith.cmpf ogt, %44, %45 : vector<8x12xf32>
    %cst_30 = arith.constant 0.000000e+00 : f32
    %47 = vector.broadcast %cst_30 : f32 to vector<8x12xf32>
    %48 = arith.minimumf %44, %47 : vector<8x12xf32>
    %49 = math.exp %48 : vector<8x12xf32>
    %cst_31 = arith.constant 1.000000e+00 : f32
    %50 = vector.broadcast %cst_31 : f32 to vector<8x12xf32>
    %51 = arith.subf %49, %50 : vector<8x12xf32>
    %52 = arith.select %46, %44, %51 : vector<8x12xi1>, vector<8x12xf32>
    %c0_32 = arith.constant 0 : index
    %c0_33 = arith.constant 0 : index
    %53 = vector.load %arg10[%c0_32, %c0_33] : memref<12x64xf32, #tpu.memory_space<vmem>>, vector<12x64xf32>
    %c0_34 = arith.constant 0 : index
    %c0_35 = arith.constant 0 : index
    %54 = vector.load %arg11[%c0_34, %c0_35] : memref<1x64xf32, #tpu.memory_space<vmem>>, vector<1x64xf32>
    %cst_36 = arith.constant dense<0.000000e+00> : vector<8x64xf32>
    %55 = tpu.matmul %52, %53, %cst_36 {dimension_numbers = #tpu.dot_dimension_numbers<[1], [0], [0], [1], [0, 0, 1, 1], [], []>} : vector<8x12xf32>, vector<12x64xf32>, vector<8x64xf32> -> vector<8x64xf32>
    %56 = vector.broadcast %54 : vector<1x64xf32> to vector<8x64xf32>
    %57 = arith.addf %55, %56 : vector<8x64xf32>
    %cst_37 = arith.constant 0.000000e+00 : f32
    %58 = vector.broadcast %cst_37 : f32 to vector<8x64xf32>
    %59 = arith.cmpf ogt, %57, %58 : vector<8x64xf32>
    %cst_38 = arith.constant 0.000000e+00 : f32
    %60 = vector.broadcast %cst_38 : f32 to vector<8x64xf32>
    %61 = arith.minimumf %57, %60 : vector<8x64xf32>
    %62 = math.exp %61 : vector<8x64xf32>
    %cst_39 = arith.constant 1.000000e+00 : f32
    %63 = vector.broadcast %cst_39 : f32 to vector<8x64xf32>
    %64 = arith.subf %62, %63 : vector<8x64xf32>
    %65 = arith.select %59, %57, %64 : vector<8x64xi1>, vector<8x64xf32>
    %c0_40 = arith.constant 0 : index
    %c0_41 = arith.constant 0 : index
    %66 = vector.load %arg12[%c0_40, %c0_41] : memref<64x128xf32, #tpu.memory_space<vmem>>, vector<64x128xf32>
    %c0_42 = arith.constant 0 : index
    %c0_43 = arith.constant 0 : index
    %67 = vector.load %arg13[%c0_42, %c0_43] : memref<1x128xf32, #tpu.memory_space<vmem>>, vector<1x128xf32>
    %cst_44 = arith.constant dense<0.000000e+00> : vector<8x128xf32>
    %68 = tpu.matmul %65, %66, %cst_44 {dimension_numbers = #tpu.dot_dimension_numbers<[1], [0], [0], [1], [0, 0, 1, 1], [], []>} : vector<8x64xf32>, vector<64x128xf32>, vector<8x128xf32> -> vector<8x128xf32>
    %69 = vector.broadcast %67 : vector<1x128xf32> to vector<8x128xf32>
    %70 = arith.addf %68, %69 : vector<8x128xf32>
    %cst_45 = arith.constant 0.000000e+00 : f32
    %71 = vector.broadcast %cst_45 : f32 to vector<8x128xf32>
    %72 = arith.cmpf ogt, %70, %71 : vector<8x128xf32>
    %cst_46 = arith.constant 0.000000e+00 : f32
    %73 = vector.broadcast %cst_46 : f32 to vector<8x128xf32>
    %74 = arith.minimumf %70, %73 : vector<8x128xf32>
    %75 = math.exp %74 : vector<8x128xf32>
    %cst_47 = arith.constant 1.000000e+00 : f32
    %76 = vector.broadcast %cst_47 : f32 to vector<8x128xf32>
    %77 = arith.subf %75, %76 : vector<8x128xf32>
    %78 = arith.select %72, %70, %77 : vector<8x128xi1>, vector<8x128xf32>
    %c0_48 = arith.constant 0 : index
    %c0_49 = arith.constant 0 : index
    %79 = vector.load %arg14[%c0_48, %c0_49] : memref<128x784xf32, #tpu.memory_space<vmem>>, vector<128x784xf32>
    %c0_50 = arith.constant 0 : index
    %c0_51 = arith.constant 0 : index
    %80 = vector.load %arg15[%c0_50, %c0_51] : memref<1x784xf32, #tpu.memory_space<vmem>>, vector<1x784xf32>
    %cst_52 = arith.constant dense<0.000000e+00> : vector<8x784xf32>
    %81 = tpu.matmul %78, %79, %cst_52 {dimension_numbers = #tpu.dot_dimension_numbers<[1], [0], [0], [1], [0, 0, 1, 1], [], []>} : vector<8x128xf32>, vector<128x784xf32>, vector<8x784xf32> -> vector<8x784xf32>
    %82 = vector.broadcast %80 : vector<1x784xf32> to vector<8x784xf32>
    %83 = arith.addf %81, %82 : vector<8x784xf32>
    %c0_53 = arith.constant 0 : index
    %c0_54 = arith.constant 0 : index
    %84 = vector.load %arg16[%c0_53, %c0_54] : memref<8x784xf32, #tpu.memory_space<vmem>>, vector<8x784xf32>
    tpu.vector_store %arg16[%c0_53, %c0_54], %83 {strides = array<i32>} : memref<8x784xf32, #tpu.memory_space<vmem>>, vector<8x784xf32>,
    return
  }
  func.func @transform_0(%arg0: i32) -> (i32, i32) {
    %c0_i32 = arith.constant 0 : i32
    %c0_i32_0 = arith.constant 0 : i32
    return %arg0, %c0_i32 : i32, i32
  }
  func.func @transform_1(%arg0: i32) -> (i32, i32) {
    %c0_i32 = arith.constant 0 : i32
    %c0_i32_0 = arith.constant 0 : i32
    %c0_i32_1 = arith.constant 0 : i32
    return %c0_i32, %c0_i32_0 : i32, i32
  }
  func.func @transform_2(%arg0: i32) -> (i32, i32) {
    %c0_i32 = arith.constant 0 : i32
    %c0_i32_0 = arith.constant 0 : i32
    %c0_i32_1 = arith.constant 0 : i32
    return %c0_i32, %c0_i32_0 : i32, i32
  }
  func.func @transform_3(%arg0: i32) -> (i32, i32) {
    %c0_i32 = arith.constant 0 : i32
    %c0_i32_0 = arith.constant 0 : i32
    %c0_i32_1 = arith.constant 0 : i32
    return %c0_i32, %c0_i32_0 : i32, i32
  }
  func.func @transform_4(%arg0: i32) -> (i32, i32) {
    %c0_i32 = arith.constant 0 : i32
    %c0_i32_0 = arith.constant 0 : i32
    %c0_i32_1 = arith.constant 0 : i32
    return %c0_i32, %c0_i32_0 : i32, i32
  }
  func.func @transform_5(%arg0: i32) -> (i32, i32) {
    %c0_i32 = arith.constant 0 : i32
    %c0_i32_0 = arith.constant 0 : i32
    %c0_i32_1 = arith.constant 0 : i32
    return %c0_i32, %c0_i32_0 : i32, i32
  }
  func.func @transform_6(%arg0: i32) -> (i32, i32) {
    %c0_i32 = arith.constant 0 : i32
    %c0_i32_0 = arith.constant 0 : i32
    %c0_i32_1 = arith.constant 0 : i32
    return %c0_i32, %c0_i32_0 : i32, i32
  }
  func.func @transform_7(%arg0: i32) -> (i32, i32) {
    %c0_i32 = arith.constant 0 : i32
    %c0_i32_0 = arith.constant 0 : i32
    %c0_i32_1 = arith.constant 0 : i32
    return %c0_i32, %c0_i32_0 : i32, i32
  }
  func.func @transform_8(%arg0: i32) -> (i32, i32) {
    %c0_i32 = arith.constant 0 : i32
    %c0_i32_0 = arith.constant 0 : i32
    %c0_i32_1 = arith.constant 0 : i32
    return %c0_i32, %c0_i32_0 : i32, i32
  }
  func.func @transform_9(%arg0: i32) -> (i32, i32) {
    %c0_i32 = arith.constant 0 : i32
    %c0_i32_0 = arith.constant 0 : i32
    %c0_i32_1 = arith.constant 0 : i32
    return %c0_i32, %c0_i32_0 : i32, i32
  }
  func.func @transform_10(%arg0: i32) -> (i32, i32) {
    %c0_i32 = arith.constant 0 : i32
    %c0_i32_0 = arith.constant 0 : i32
    %c0_i32_1 = arith.constant 0 : i32
    return %c0_i32, %c0_i32_0 : i32, i32
  }
  func.func @transform_11(%arg0: i32) -> (i32, i32) {
    %c0_i32 = arith.constant 0 : i32
    %c0_i32_0 = arith.constant 0 : i32
    %c0_i32_1 = arith.constant 0 : i32
    return %c0_i32, %c0_i32_0 : i32, i32
  }
  func.func @transform_12(%arg0: i32) -> (i32, i32) {
    %c0_i32 = arith.constant 0 : i32
    %c0_i32_0 = arith.constant 0 : i32
    %c0_i32_1 = arith.constant 0 : i32
    return %c0_i32, %c0_i32_0 : i32, i32
  }
  func.func @transform_13(%arg0: i32) -> (i32, i32) {
    %c0_i32 = arith.constant 0 : i32
    %c0_i32_0 = arith.constant 0 : i32
    %c0_i32_1 = arith.constant 0 : i32
    return %c0_i32, %c0_i32_0 : i32, i32
  }
  func.func @transform_14(%arg0: i32) -> (i32, i32) {
    %c0_i32 = arith.constant 0 : i32
    %c0_i32_0 = arith.constant 0 : i32
    %c0_i32_1 = arith.constant 0 : i32
    return %c0_i32, %c0_i32_0 : i32, i32
  }
  func.func @transform_15(%arg0: i32) -> (i32, i32) {
    %c0_i32 = arith.constant 0 : i32
    %c0_i32_0 = arith.constant 0 : i32
    return %arg0, %c0_i32 : i32, i32
  }
}

</mosaic_0001>

<llo_original>
// kernel: tpu_custom_call.1
$region0: #{tpu_custom_call.1}
  #allocation0 [shape = 'u32[]', space=smem, size = 0x4, offset = 0x4, fixed_abs, tag = 'smem constant byte address 0x4 - core index']
  #allocation1 [shape = 'u32[72,128]{1,0:T(1,128)}', space=vmem, size = 0x9000, scoped, tag = 'internal scratch']
  %s0 = inlined_call_operand.vmem [shape: f32[8,784], index: 0, kind: input, shape index: {}]
  %s1 = inlined_call_operand.vmem [shape: f32[784,128], index: 1, kind: input, shape index: {}]
  %s2 = inlined_call_operand.vmem [shape: f32[1,128], index: 2, kind: input, shape index: {}]
  %s3 = inlined_call_operand.vmem [shape: f32[128,64], index: 3, kind: input, shape index: {}]
  %s4 = inlined_call_operand.vmem [shape: f32[1,64], index: 4, kind: input, shape index: {}]
  %s5 = inlined_call_operand.vmem [shape: f32[64,12], index: 5, kind: input, shape index: {}]
  %s6 = inlined_call_operand.vmem [shape: f32[1,12], index: 6, kind: input, shape index: {}]
  %s7 = inlined_call_operand.vmem [shape: f32[12,12], index: 7, kind: input, shape index: {}]
  %s8 = inlined_call_operand.vmem [shape: f32[1,12], index: 8, kind: input, shape index: {}]
  %s9 = inlined_call_operand.vmem [shape: f32[12,64], index: 9, kind: input, shape index: {}]
  %s10 = inlined_call_operand.vmem [shape: f32[1,64], index: 10, kind: input, shape index: {}]
  %s11 = inlined_call_operand.vmem [shape: f32[64,128], index: 11, kind: input, shape index: {}]
  %s12 = inlined_call_operand.vmem [shape: f32[1,128], index: 12, kind: input, shape index: {}]
  %s13 = inlined_call_operand.vmem [shape: f32[128,784], index: 13, kind: input, shape index: {}]
  %s14 = inlined_call_operand.vmem [shape: f32[1,784], index: 14, kind: input, shape index: {}]
  %s15 = inlined_call_operand.hbm [shape: f32[8,784], index: 15, kind: output, shape index: {}]
  %s16 = sld [smem:[#allocation0]]
  $region70: #{tpu_custom_call.1} parent=0
    _
  %s18 = ssub.s32 1, %s16
  %s19 = scalar_select 0, %s18, %s16
  $region1: #{tpu_custom_call.1} parent=0
    #allocation2 [shape = 'u8[28672]{0}', space=vmem, size = 0x7000, scoped, tag = 'output window, operand 0, single buffered']
    #allocation3 [shape = 's32[1]{0}', space=sflag, size = 0x4, scoped, tag = 'scoped memory for tpu_custom_call.1']
    %20 = vsyncpa [#allocation3], 0
    // Predicated region
    $region2: #{tpu_custom_call.1} parent=1 // pred_check
      _
    $region3: #{tpu_custom_call.1} parent=1 // pred_check_branch
      %22 = sbr.rel (0) target = $region5
    $region4: #{tpu_custom_call.1} parent=1 // pred_region
      _
    $region5: #{tpu_custom_call.1} parent=1 // pred_fallthru
      _
    // Predicated region
    $region6: #{tpu_custom_call.1} parent=1 // pred_check
      _
    $region7: #{tpu_custom_call.1} parent=1 // pred_check_branch
      %24 = sbr.rel (0) target = $region9
    $region8: #{tpu_custom_call.1} parent=1 // pred_region
      _
    $region9: #{tpu_custom_call.1} parent=1 // pred_fallthru
      _
    // Predicated region
    $region10: #{tpu_custom_call.1} parent=1 // pred_check
      _
    $region11: #{tpu_custom_call.1} parent=1 // pred_check_branch
      %26 = sbr.rel (0) target = $region13
    $region12: #{tpu_custom_call.1} parent=1 // pred_region
      _
    $region13: #{tpu_custom_call.1} parent=1 // pred_fallthru
      _
    // Predicated region
    $region14: #{tpu_custom_call.1} parent=1 // pred_check
      _
    $region15: #{tpu_custom_call.1} parent=1 // pred_check_branch
      %28 = sbr.rel (0) target = $region17
    $region16: #{tpu_custom_call.1} parent=1 // pred_region
      _
    $region17: #{tpu_custom_call.1} parent=1 // pred_fallthru
      _
    // Predicated region
    $region18: #{tpu_custom_call.1} parent=1 // pred_check
      _
    $region19: #{tpu_custom_call.1} parent=1 // pred_check_branch
      %30 = sbr.rel (0) target = $region21
    $region20: #{tpu_custom_call.1} parent=1 // pred_region
      _
    $region21: #{tpu_custom_call.1} parent=1 // pred_fallthru
      _
    // Predicated region
    $region22: #{tpu_custom_call.1} parent=1 // pred_check
      _
    $region23: #{tpu_custom_call.1} parent=1 // pred_check_branch
      %32 = sbr.rel (0) target = $region25
    $region24: #{tpu_custom_call.1} parent=1 // pred_region
      _
    $region25: #{tpu_custom_call.1} parent=1 // pred_fallthru
      _
    // Predicated region
    $region26: #{tpu_custom_call.1} parent=1 // pred_check
      _
    $region27: #{tpu_custom_call.1} parent=1 // pred_check_branch
      %34 = sbr.rel (0) target = $region29
    $region28: #{tpu_custom_call.1} parent=1 // pred_region
      _
    $region29: #{tpu_custom_call.1} parent=1 // pred_fallthru
      _
    // Predicated region
    $region30: #{tpu_custom_call.1} parent=1 // pred_check
      _
    $region31: #{tpu_custom_call.1} parent=1 // pred_check_branch
      %36 = sbr.rel (0) target = $region33
    $region32: #{tpu_custom_call.1} parent=1 // pred_region
      _
    $region33: #{tpu_custom_call.1} parent=1 // pred_fallthru
      _
    // Predicated region
    $region34: #{tpu_custom_call.1} parent=1 // pred_check
      _
    $region35: #{tpu_custom_call.1} parent=1 // pred_check_branch
      %38 = sbr.rel (0) target = $region37
    $region36: #{tpu_custom_call.1} parent=1 // pred_region
      _
    $region37: #{tpu_custom_call.1} parent=1 // pred_fallthru
      _
    // Predicated region
    $region38: #{tpu_custom_call.1} parent=1 // pred_check
      _
    $region39: #{tpu_custom_call.1} parent=1 // pred_check_branch
      %40 = sbr.rel (0) target = $region41
    $region40: #{tpu_custom_call.1} parent=1 // pred_region
      _
    $region41: #{tpu_custom_call.1} parent=1 // pred_fallthru
      _
    // Predicated region
    $region42: #{tpu_custom_call.1} parent=1 // pred_check
      _
    $region43: #{tpu_custom_call.1} parent=1 // pred_check_branch
      %42 = sbr.rel (0) target = $region45
    $region44: #{tpu_custom_call.1} parent=1 // pred_region
      _
    $region45: #{tpu_custom_call.1} parent=1 // pred_fallthru
      _
    // Predicated region
    $region46: #{tpu_custom_call.1} parent=1 // pred_check
      _
    $region47: #{tpu_custom_call.1} parent=1 // pred_check_branch
      %44 = sbr.rel (0) target = $region49
    $region48: #{tpu_custom_call.1} parent=1 // pred_region
      _
    $region49: #{tpu_custom_call.1} parent=1 // pred_fallthru
      _
    // Predicated region
    $region50: #{tpu_custom_call.1} parent=1 // pred_check
      _
    $region51: #{tpu_custom_call.1} parent=1 // pred_check_branch
      %46 = sbr.rel (0) target = $region53
    $region52: #{tpu_custom_call.1} parent=1 // pred_region
      _
    $region53: #{tpu_custom_call.1} parent=1 // pred_fallthru
      _
    // Predicated region
    $region54: #{tpu_custom_call.1} parent=1 // pred_check
      _
    $region55: #{tpu_custom_call.1} parent=1 // pred_check_branch
      %48 = sbr.rel (0) target = $region57
    $region56: #{tpu_custom_call.1} parent=1 // pred_region
      _
    $region57: #{tpu_custom_call.1} parent=1 // pred_fallthru
      _
    // Predicated region
    $region58: #{tpu_custom_call.1} parent=1 // pred_check
      _
    $region59: #{tpu_custom_call.1} parent=1 // pred_check_branch
      %50 = sbr.rel (0) target = $region61
    $region60: #{tpu_custom_call.1} parent=1 // pred_region
      _
    $region61: #{tpu_custom_call.1} parent=1 // pred_fallthru
      _
    %v51 = vld [vmem:[%s0] sm:$0xff]
    %v52 = vld [vmem:[%s0 + $0x8] sm:$0xff]
    %v53 = vld [vmem:[%s0 + $0x10] sm:$0xff]
    %v54 = vld [vmem:[%s0 + $0x18] sm:$0xff]
    %v55 = vld [vmem:[%s0 + $0x20] sm:$0xff]
    %v56 = vld [vmem:[%s0 + $0x28] sm:$0xff]
    %v57 = vld [vmem:[%s0 + $0x30] sm:$0xff]
    %v58 = vld [vmem:[%s1] sm:$0xff]
    %v59 = vld [vmem:[%s1 + $0x8] sm:$0xff]
    %v60 = vld [vmem:[%s1 + $0x10] sm:$0xff]
    %v61 = vld [vmem:[%s1 + $0x18] sm:$0xff]
    %v62 = vld [vmem:[%s1 + $0x20] sm:$0xff]
    %v63 = vld [vmem:[%s1 + $0x28] sm:$0xff]
    %v64 = vld [vmem:[%s1 + $0x30] sm:$0xff]
    %v65 = vld [vmem:[%s1 + $0x38] sm:$0xff]
    %v66 = vld [vmem:[%s1 + $0x40] sm:$0xff]
    %v67 = vld [vmem:[%s1 + $0x48] sm:$0xff]
    %v68 = vld [vmem:[%s1 + $0x50] sm:$0xff]
    %v69 = vld [vmem:[%s1 + $0x58] sm:$0xff]
    %v70 = vld [vmem:[%s1 + $0x60] sm:$0xff]
    %v71 = vld [vmem:[%s1 + $0x68] sm:$0xff]
    %v72 = vld [vmem:[%s1 + $0x70] sm:$0xff]
    %v73 = vld [vmem:[%s1 + $0x78] sm:$0xff]
    %v74 = vld [vmem:[%s1 + $0x80] sm:$0xff]
    %v75 = vld [vmem:[%s1 + $0x88] sm:$0xff]
    %v76 = vld [vmem:[%s1 + $0x90] sm:$0xff]
    %v77 = vld [vmem:[%s1 + $0x98] sm:$0xff]
    %v78 = vld [vmem:[%s1 + $0xa0] sm:$0xff]
    %v79 = vld [vmem:[%s1 + $0xa8] sm:$0xff]
    %v80 = vld [vmem:[%s1 + $0xb0] sm:$0xff]
    %v81 = vld [vmem:[%s1 + $0xb8] sm:$0xff]
    %v82 = vld [vmem:[%s1 + $0xc0] sm:$0xff]
    %v83 = vld [vmem:[%s1 + $0xc8] sm:$0xff]
    %v84 = vld [vmem:[%s1 + $0xd0] sm:$0xff]
    %v85 = vld [vmem:[%s1 + $0xd8] sm:$0xff]
    %v86 = vld [vmem:[%s1 + $0xe0] sm:$0xff]
    %v87 = vld [vmem:[%s1 + $0xe8] sm:$0xff]
    %v88 = vld [vmem:[%s1 + $0xf0] sm:$0xff]
    %v89 = vld [vmem:[%s1 + $0xf8] sm:$0xff]
    %v90 = vld [vmem:[%s1 + $0x100] sm:$0xff]
    %v91 = vld [vmem:[%s1 + $0x108] sm:$0xff]
    %v92 = vld [vmem:[%s1 + $0x110] sm:$0xff]
    %v93 = vld [vmem:[%s1 + $0x118] sm:$0xff]
    %v94 = vld [vmem:[%s1 + $0x120] sm:$0xff]
    %v95 = vld [vmem:[%s1 + $0x128] sm:$0xff]
    %v96 = vld [vmem:[%s1 + $0x130] sm:$0xff]
    %v97 = vld [vmem:[%s1 + $0x138] sm:$0xff]
    %v98 = vld [vmem:[%s1 + $0x140] sm:$0xff]
    %v99 = vld [vmem:[%s1 + $0x148] sm:$0xff]
    %v100 = vld [vmem:[%s1 + $0x150] sm:$0xff]
    %v101 = vld [vmem:[%s1 + $0x158] sm:$0xff]
    %v102 = vld [vmem:[%s1 + $0x160] sm:$0xff]
    %v103 = vld [vmem:[%s1 + $0x168] sm:$0xff]
    %v104 = vld [vmem:[%s1 + $0x170] sm:$0xff]
    %v105 = vld [vmem:[%s1 + $0x178] sm:$0xff]
    %v106 = vld [vmem:[%s1 + $0x180] sm:$0xff]
    %v107 = vld [vmem:[%s1 + $0x188] sm:$0xff]
    %v108 = vld [vmem:[%s1 + $0x190] sm:$0xff]
    %v109 = vld [vmem:[%s1 + $0x198] sm:$0xff]
    %v110 = vld [vmem:[%s1 + $0x1a0] sm:$0xff]
    %v111 = vld [vmem:[%s1 + $0x1a8] sm:$0xff]
    %v112 = vld [vmem:[%s1 + $0x1b0] sm:$0xff]
    %v113 = vld [vmem:[%s1 + $0x1b8] sm:$0xff]
    %v114 = vld [vmem:[%s1 + $0x1c0] sm:$0xff]
    %v115 = vld [vmem:[%s1 + $0x1c8] sm:$0xff]
    %v116 = vld [vmem:[%s1 + $0x1d0] sm:$0xff]
    %v117 = vld [vmem:[%s1 + $0x1d8] sm:$0xff]
    %v118 = vld [vmem:[%s1 + $0x1e0] sm:$0xff]
    %v119 = vld [vmem:[%s1 + $0x1e8] sm:$0xff]
    %v120 = vld [vmem:[%s1 + $0x1f0] sm:$0xff]
    %v121 = vld [vmem:[%s1 + $0x1f8] sm:$0xff]
    %v122 = vld [vmem:[%s1 + $0x200] sm:$0xff]
    %v123 = vld [vmem:[%s1 + $0x208] sm:$0xff]
    %v124 = vld [vmem:[%s1 + $0x210] sm:$0xff]
    %v125 = vld [vmem:[%s1 + $0x218] sm:$0xff]
    %v126 = vld [vmem:[%s1 + $0x220] sm:$0xff]
    %v127 = vld [vmem:[%s1 + $0x228] sm:$0xff]
    %v128 = vld [vmem:[%s1 + $0x230] sm:$0xff]
    %v129 = vld [vmem:[%s1 + $0x238] sm:$0xff]
    %v130 = vld [vmem:[%s1 + $0x240] sm:$0xff]
    %v131 = vld [vmem:[%s1 + $0x248] sm:$0xff]
    %v132 = vld [vmem:[%s1 + $0x250] sm:$0xff]
    %v133 = vld [vmem:[%s1 + $0x258] sm:$0xff]
    %v134 = vld [vmem:[%s1 + $0x260] sm:$0xff]
    %v135 = vld [vmem:[%s1 + $0x268] sm:$0xff]
    %v136 = vld [vmem:[%s1 + $0x270] sm:$0xff]
    %v137 = vld [vmem:[%s1 + $0x278] sm:$0xff]
    %v138 = vld [vmem:[%s1 + $0x280] sm:$0xff]
    %v139 = vld [vmem:[%s1 + $0x288] sm:$0xff]
    %v140 = vld [vmem:[%s1 + $0x290] sm:$0xff]
    %v141 = vld [vmem:[%s1 + $0x298] sm:$0xff]
    %v142 = vld [vmem:[%s1 + $0x2a0] sm:$0xff]
    %v143 = vld [vmem:[%s1 + $0x2a8] sm:$0xff]
    %v144 = vld [vmem:[%s1 + $0x2b0] sm:$0xff]
    %v145 = vld [vmem:[%s1 + $0x2b8] sm:$0xff]
    %v146 = vld [vmem:[%s1 + $0x2c0] sm:$0xff]
    %v147 = vld [vmem:[%s1 + $0x2c8] sm:$0xff]
    %v148 = vld [vmem:[%s1 + $0x2d0] sm:$0xff]
    %v149 = vld [vmem:[%s1 + $0x2d8] sm:$0xff]
    %v150 = vld [vmem:[%s1 + $0x2e0] sm:$0xff]
    %v151 = vld [vmem:[%s1 + $0x2e8] sm:$0xff]
    %v152 = vld [vmem:[%s1 + $0x2f0] sm:$0xff]
    %v153 = vld [vmem:[%s1 + $0x2f8] sm:$0xff]
    %v154 = vld [vmem:[%s1 + $0x300] sm:$0xff]
    %v155 = vld [vmem:[%s1 + $0x308] sm:$0xff]
    %v156 = vld [vmem:[%s2] sm:$0x1]
    %v158 = vperm.slane %v156, 0
    %vm160 = vcmask 130048
    %v162 = vsel %vm160, %v57, 0
    %164 = vmatpush.msra.mxu0 %v73
    %165 = vmatpush.msra.mxu0 %v72
    %166 = vmatpush.msra.mxu0 %v71
    %167 = vmatpush.msra.mxu0 %v70
    %168 = vmatpush.msra.mxu0 %v69
    %169 = vmatpush.msra.mxu0 %v68
    %170 = vmatpush.msra.mxu0 %v67
    %171 = vmatpush.msra.mxu0 %v66
    %172 = vmatpush.msra.mxu0 %v65
    %173 = vmatpush.msra.mxu0 %v64
    %174 = vmatpush.msra.mxu0 %v63
    %175 = vmatpush.msra.mxu0 %v62
    %176 = vmatpush.msra.mxu0 %v61
    %177 = vmatpush.msra.mxu0 %v60
    %178 = vmatpush.msra.mxu0 %v59
    %179 = vmatpush.msra.mxu0 %v58
    %180 = vmatmul.f32.gmra.mxu0 %v51
    %v181 = vpop.f32.mrf.mxu0
    %v182 = vadd.f32 %v158, %v181
    %183 = vdwg.mxu0
    %184 = vmatpush.msra.mxu0 %v89
    %185 = vmatpush.msra.mxu0 %v88
    %186 = vmatpush.msra.mxu0 %v87
    %187 = vmatpush.msra.mxu0 %v86
    %188 = vmatpush.msra.mxu0 %v85
    %189 = vmatpush.msra.mxu0 %v84
    %190 = vmatpush.msra.mxu0 %v83
    %191 = vmatpush.msra.mxu0 %v82
    %192 = vmatpush.msra.mxu0 %v81
    %193 = vmatpush.msra.mxu0 %v80
    %194 = vmatpush.msra.mxu0 %v79
    %195 = vmatpush.msra.mxu0 %v78
    %196 = vmatpush.msra.mxu0 %v77
    %197 = vmatpush.msra.mxu0 %v76
    %198 = vmatpush.msra.mxu0 %v75
    %199 = vmatpush.msra.mxu0 %v74
    %200 = vmatmul.f32.gmra.mxu0 %v52
    %v201 = vpop.f32.mrf.mxu0
    %v202 = vadd.f32 %v182, %v201
    %203 = vdwg.mxu0
    %204 = vmatpush.msra.mxu0 %v105
    %205 = vmatpush.msra.mxu0 %v104
    %206 = vmatpush.msra.mxu0 %v103
    %207 = vmatpush.msra.mxu0 %v102
    %208 = vmatpush.msra.mxu0 %v101
    %209 = vmatpush.msra.mxu0 %v100
    %210 = vmatpush.msra.mxu0 %v99
    %211 = vmatpush.msra.mxu0 %v98
    %212 = vmatpush.msra.mxu0 %v97
    %213 = vmatpush.msra.mxu0 %v96
    %214 = vmatpush.msra.mxu0 %v95
    %215 = vmatpush.msra.mxu0 %v94
    %216 = vmatpush.msra.mxu0 %v93
    %217 = vmatpush.msra.mxu0 %v92
    %218 = vmatpush.msra.mxu0 %v91
    %219 = vmatpush.msra.mxu0 %v90
    %220 = vmatmul.f32.gmra.mxu0 %v53
    %v221 = vpop.f32.mrf.mxu0
    %v222 = vadd.f32 %v202, %v221
    %223 = vdwg.mxu0
    %224 = vmatpush.msra.mxu0 %v121
    %225 = vmatpush.msra.mxu0 %v120
    %226 = vmatpush.msra.mxu0 %v119
    %227 = vmatpush.msra.mxu0 %v118
    %228 = vmatpush.msra.mxu0 %v117
    %229 = vmatpush.msra.mxu0 %v116
    %230 = vmatpush.msra.mxu0 %v115
    %231 = vmatpush.msra.mxu0 %v114
    %232 = vmatpush.msra.mxu0 %v113
    %233 = vmatpush.msra.mxu0 %v112
    %234 = vmatpush.msra.mxu0 %v111
    %235 = vmatpush.msra.mxu0 %v110
    %236 = vmatpush.msra.mxu0 %v109
    %237 = vmatpush.msra.mxu0 %v108
    %238 = vmatpush.msra.mxu0 %v107
    %239 = vmatpush.msra.mxu0 %v106
    %240 = vmatmul.f32.gmra.mxu0 %v54
    %v241 = vpop.f32.mrf.mxu0
    %v242 = vadd.f32 %v222, %v241
    %243 = vdwg.mxu0
    %244 = vmatpush.msra.mxu0 %v137
    %245 = vmatpush.msra.mxu0 %v136
    %246 = vmatpush.msra.mxu0 %v135
    %247 = vmatpush.msra.mxu0 %v134
    %248 = vmatpush.msra.mxu0 %v133
    %249 = vmatpush.msra.mxu0 %v132
    %250 = vmatpush.msra.mxu0 %v131
    %251 = vmatpush.msra.mxu0 %v130
    %252 = vmatpush.msra.mxu0 %v129
    %253 = vmatpush.msra.mxu0 %v128
    %254 = vmatpush.msra.mxu0 %v127
    %255 = vmatpush.msra.mxu0 %v126
    %256 = vmatpush.msra.mxu0 %v125
    %257 = vmatpush.msra.mxu0 %v124
    %258 = vmatpush.msra.mxu0 %v123
    %259 = vmatpush.msra.mxu0 %v122
    %260 = vmatmul.f32.gmra.mxu0 %v55
    %v261 = vpop.f32.mrf.mxu0
    %v262 = vadd.f32 %v242, %v261
    %263 = vdwg.mxu0
    %264 = vmatpush.msra.mxu0 %v153
    %265 = vmatpush.msra.mxu0 %v152
    %266 = vmatpush.msra.mxu0 %v151
    %267 = vmatpush.msra.mxu0 %v150
    %268 = vmatpush.msra.mxu0 %v149
    %269 = vmatpush.msra.mxu0 %v148
    %270 = vmatpush.msra.mxu0 %v147
    %271 = vmatpush.msra.mxu0 %v146
    %272 = vmatpush.msra.mxu0 %v145
    %273 = vmatpush.msra.mxu0 %v144
    %274 = vmatpush.msra.mxu0 %v143
    %275 = vmatpush.msra.mxu0 %v142
    %276 = vmatpush.msra.mxu0 %v141
    %277 = vmatpush.msra.mxu0 %v140
    %278 = vmatpush.msra.mxu0 %v139
    %279 = vmatpush.msra.mxu0 %v138
    %280 = vmatmul.f32.gmra.mxu0 %v56
    %v281 = vpop.f32.mrf.mxu0
    %v282 = vadd.f32 %v262, %v281
    %283 = vdwg.mxu0
    %284 = vmatpush.msra.mxu0 0.0
    %285 = vmatpush.msra.mxu0 0.0
    %286 = vmatpush.msra.mxu0 0.0
    %287 = vmatpush.msra.mxu0 0.0
    %288 = vmatpush.msra.mxu0 0.0
    %289 = vmatpush.msra.mxu0 0.0
    %290 = vmatpush.msra.mxu0 0.0
    %291 = vmatpush.msra.mxu0 0.0
    %292 = vmatpush.msra.mxu0 0.0
    %293 = vmatpush.msra.mxu0 0.0
    %294 = vmatpush.msra.mxu0 0.0
    %295 = vmatpush.msra.mxu0 0.0
    %296 = vmatpush.msra.mxu0 0.0
    %297 = vmatpush.msra.mxu0 0.0
    %298 = vmatpush.msra.mxu0 %v155
    %299 = vmatpush.msra.mxu0 %v154
    %300 = vmatmul.f32.gmra.mxu0 %v162
    %v301 = vpop.f32.mrf.mxu0
    %v302 = vadd.f32 %v282, %v301
    %303 = vdwg.mxu0
    %vm304 = vcmp.gt.f32.partialorder %v302, 0.0
    %v305 = vmin.f32 %v302, 0.0
    %v306 = vmul.f32 %v305, 1.442695
    %v307 = vpow.pop %v306
    %v308 = vsub.f32 %v307, 1.0
    %v309 = vsel %vm304, %v302, %v308
    %v310 = vld [vmem:[%s3] sm:$0xff]
    %v311 = vld [vmem:[%s3 + $0x8] sm:$0xff]
    %v312 = vld [vmem:[%s3 + $0x10] sm:$0xff]
    %v313 = vld [vmem:[%s3 + $0x18] sm:$0xff]
    %v314 = vld [vmem:[%s3 + $0x20] sm:$0xff]
    %v315 = vld [vmem:[%s3 + $0x28] sm:$0xff]
    %v316 = vld [vmem:[%s3 + $0x30] sm:$0xff]
    %v317 = vld [vmem:[%s3 + $0x38] sm:$0xff]
    %v318 = vld [vmem:[%s3 + $0x40] sm:$0xff]
    %v319 = vld [vmem:[%s3 + $0x48] sm:$0xff]
    %v320 = vld [vmem:[%s3 + $0x50] sm:$0xff]
    %v321 = vld [vmem:[%s3 + $0x58] sm:$0xff]
    %v322 = vld [vmem:[%s3 + $0x60] sm:$0xff]
    %v323 = vld [vmem:[%s3 + $0x68] sm:$0xff]
    %v324 = vld [vmem:[%s3 + $0x70] sm:$0xff]
    %v325 = vld [vmem:[%s3 + $0x78] sm:$0xff]
    %v326 = vld [vmem:[%s4] sm:$0x1]
    %v328 = vperm.slane %v326, 0
    %330 = vmatpush.msra.mxu0 %v325
    %331 = vmatpush.msra.mxu0 %v324
    %332 = vmatpush.msra.mxu0 %v323
    %333 = vmatpush.msra.mxu0 %v322
    %334 = vmatpush.msra.mxu0 %v321
    %335 = vmatpush.msra.mxu0 %v320
    %336 = vmatpush.msra.mxu0 %v319
    %337 = vmatpush.msra.mxu0 %v318
    %338 = vmatpush.msra.mxu0 %v317
    %339 = vmatpush.msra.mxu0 %v316
    %340 = vmatpush.msra.mxu0 %v315
    %341 = vmatpush.msra.mxu0 %v314
    %342 = vmatpush.msra.mxu0 %v313
    %343 = vmatpush.msra.mxu0 %v312
    %344 = vmatpush.msra.mxu0 %v311
    %345 = vmatpush.msra.mxu0 %v310
    %346 = vmatmul.f32.gmra.mxu0 %v309
    %v347 = vpop.f32.mrf.mxu0
    %v348 = vadd.f32 %v328, %v347
    %349 = vdwg.mxu0
    %vm350 = vcmp.gt.f32.partialorder %v348, 0.0
    %v351 = vmin.f32 %v348, 0.0
    %v352 = vmul.f32 %v351, 1.442695
    %v353 = vpow.pop %v352
    %v354 = vsub.f32 %v353, 1.0
    %v355 = vsel %vm350, %v348, %v354
    %v356 = vld [vmem:[%s5] sm:$0xff]
    %v357 = vld [vmem:[%s5 + $0x8] sm:$0xff]
    %v358 = vld [vmem:[%s5 + $0x10] sm:$0xff]
    %v359 = vld [vmem:[%s5 + $0x18] sm:$0xff]
    %v360 = vld [vmem:[%s5 + $0x20] sm:$0xff]
    %v361 = vld [vmem:[%s5 + $0x28] sm:$0xff]
    %v362 = vld [vmem:[%s5 + $0x30] sm:$0xff]
    %v363 = vld [vmem:[%s5 + $0x38] sm:$0xff]
    %v364 = vld [vmem:[%s6] sm:$0x1]
    %v366 = vperm.slane %v364, 0
    %vm368 = vcmask 523264
    %v370 = vsel %vm368, %v355, 0
    %372 = vmatpush.msra.mxu0 0.0
    %373 = vmatpush.msra.mxu0 0.0
    %374 = vmatpush.msra.mxu0 0.0
    %375 = vmatpush.msra.mxu0 0.0
    %376 = vmatpush.msra.mxu0 0.0
    %377 = vmatpush.msra.mxu0 0.0
    %378 = vmatpush.msra.mxu0 0.0
    %379 = vmatpush.msra.mxu0 0.0
    %380 = vmatpush.msra.mxu0 %v363
    %381 = vmatpush.msra.mxu0 %v362
    %382 = vmatpush.msra.mxu0 %v361
    %383 = vmatpush.msra.mxu0 %v360
    %384 = vmatpush.msra.mxu0 %v359
    %385 = vmatpush.msra.mxu0 %v358
    %386 = vmatpush.msra.mxu0 %v357
    %387 = vmatpush.msra.mxu0 %v356
    %388 = vmatmul.f32.gmra.mxu0 %v370
    %v389 = vpop.f32.mrf.mxu0
    %v390 = vadd.f32 %v366, %v389
    %391 = vdwg.mxu0
    %vm392 = vcmp.gt.f32.partialorder %v390, 0.0
    %v393 = vmin.f32 %v390, 0.0
    %v394 = vmul.f32 %v393, 1.442695
    %v395 = vpow.pop %v394
    %v396 = vsub.f32 %v395, 1.0
    %v397 = vsel %vm392, %v390, %v396
    %v398 = vld [vmem:[%s7] sm:$0xff]
    %v399 = vld [vmem:[%s7 + $0x8] sm:$0xf]
    %v400 = vld [vmem:[%s8] sm:$0x1]
    %v402 = vperm.slane %v400, 0
    %vm404 = vcmask 97280
    %v406 = vsel %vm404, %v397, 0
    %vm408 = vcmask 1043456
    %v410 = vsel %vm408, %v399, 0
    %412 = vmatpush.msra.mxu0 0.0
    %413 = vmatpush.msra.mxu0 0.0
    %414 = vmatpush.msra.mxu0 0.0
    %415 = vmatpush.msra.mxu0 0.0
    %416 = vmatpush.msra.mxu0 0.0
    %417 = vmatpush.msra.mxu0 0.0
    %418 = vmatpush.msra.mxu0 0.0
    %419 = vmatpush.msra.mxu0 0.0
    %420 = vmatpush.msra.mxu0 0.0
    %421 = vmatpush.msra.mxu0 0.0
    %422 = vmatpush.msra.mxu0 0.0
    %423 = vmatpush.msra.mxu0 0.0
    %424 = vmatpush.msra.mxu0 0.0
    %425 = vmatpush.msra.mxu0 0.0
    %426 = vmatpush.msra.mxu0 %v410
    %427 = vmatpush.msra.mxu0 %v398
    %428 = vmatmul.f32.gmra.mxu0 %v406
    %v429 = vpop.f32.mrf.mxu0
    %v430 = vadd.f32 %v402, %v429
    %431 = vdwg.mxu0
    %vm432 = vcmp.gt.f32.partialorder %v430, 0.0
    %v433 = vmin.f32 %v430, 0.0
    %v434 = vmul.f32 %v433, 1.442695
    %v435 = vpow.pop %v434
    %v436 = vsub.f32 %v435, 1.0
    %v437 = vsel %vm432, %v430, %v436
    %v438 = vld [vmem:[%s9] sm:$0xff]
    %v439 = vld [vmem:[%s9 + $0x8] sm:$0xf]
    %v440 = vld [vmem:[%s10] sm:$0x1]
    %v442 = vperm.slane %v440, 0
    %v445 = vsel %vm404, %v437, 0
    %v448 = vsel %vm408, %v439, 0
    %450 = vmatpush.msra.mxu0 0.0
    %451 = vmatpush.msra.mxu0 0.0
    %452 = vmatpush.msra.mxu0 0.0
    %453 = vmatpush.msra.mxu0 0.0
    %454 = vmatpush.msra.mxu0 0.0
    %455 = vmatpush.msra.mxu0 0.0
    %456 = vmatpush.msra.mxu0 0.0
    %457 = vmatpush.msra.mxu0 0.0
    %458 = vmatpush.msra.mxu0 0.0
    %459 = vmatpush.msra.mxu0 0.0
    %460 = vmatpush.msra.mxu0 0.0
    %461 = vmatpush.msra.mxu0 0.0
    %462 = vmatpush.msra.mxu0 0.0
    %463 = vmatpush.msra.mxu0 0.0
    %464 = vmatpush.msra.mxu0 %v448
    %465 = vmatpush.msra.mxu0 %v438
    %466 = vmatmul.f32.gmra.mxu0 %v445
    %v467 = vpop.f32.mrf.mxu0
    %v468 = vadd.f32 %v442, %v467
    %469 = vdwg.mxu0
    %vm470 = vcmp.gt.f32.partialorder %v468, 0.0
    %v471 = vmin.f32 %v468, 0.0
    %v472 = vmul.f32 %v471, 1.442695
    %v473 = vpow.pop %v472
    %v474 = vsub.f32 %v473, 1.0
    %v475 = vsel %vm470, %v468, %v474
    %v476 = vld [vmem:[%s11] sm:$0xff]
    %v477 = vld [vmem:[%s11 + $0x8] sm:$0xff]
    %v478 = vld [vmem:[%s11 + $0x10] sm:$0xff]
    %v479 = vld [vmem:[%s11 + $0x18] sm:$0xff]
    %v480 = vld [vmem:[%s11 + $0x20] sm:$0xff]
    %v481 = vld [vmem:[%s11 + $0x28] sm:$0xff]
    %v482 = vld [vmem:[%s11 + $0x30] sm:$0xff]
    %v483 = vld [vmem:[%s11 + $0x38] sm:$0xff]
    %v484 = vld [vmem:[%s12] sm:$0x1]
    %v486 = vperm.slane %v484, 0
    %v489 = vsel %vm368, %v475, 0
    %491 = vmatpush.msra.mxu0 0.0
    %492 = vmatpush.msra.mxu0 0.0
    %493 = vmatpush.msra.mxu0 0.0
    %494 = vmatpush.msra.mxu0 0.0
    %495 = vmatpush.msra.mxu0 0.0
    %496 = vmatpush.msra.mxu0 0.0
    %497 = vmatpush.msra.mxu0 0.0
    %498 = vmatpush.msra.mxu0 0.0
    %499 = vmatpush.msra.mxu0 %v483
    %500 = vmatpush.msra.mxu0 %v482
    %501 = vmatpush.msra.mxu0 %v481
    %502 = vmatpush.msra.mxu0 %v480
    %503 = vmatpush.msra.mxu0 %v479
    %504 = vmatpush.msra.mxu0 %v478
    %505 = vmatpush.msra.mxu0 %v477
    %506 = vmatpush.msra.mxu0 %v476
    %507 = vmatmul.f32.gmra.mxu0 %v489
    %v508 = vpop.f32.mrf.mxu0
    %v509 = vadd.f32 %v486, %v508
    %510 = vdwg.mxu0
    %vm511 = vcmp.gt.f32.partialorder %v509, 0.0
    %v512 = vmin.f32 %v509, 0.0
    %v513 = vmul.f32 %v512, 1.442695
    %v514 = vpow.pop %v513
    %v515 = vsub.f32 %v514, 1.0
    %v516 = vsel %vm511, %v509, %v515
    %v517 = vld [vmem:[%s13] sm:$0xff]
    %v518 = vld [vmem:[%s13 + $0x8] sm:$0xff]
    %v519 = vld [vmem:[%s13 + $0x10] sm:$0xff]
    %v520 = vld [vmem:[%s13 + $0x18] sm:$0xff]
    %v521 = vld [vmem:[%s13 + $0x20] sm:$0xff]
    %v522 = vld [vmem:[%s13 + $0x28] sm:$0xff]
    %v523 = vld [vmem:[%s13 + $0x30] sm:$0xff]
    %v524 = vld [vmem:[%s13 + $0x38] sm:$0xff]
    %v525 = vld [vmem:[%s13 + $0x40] sm:$0xff]
    %v526 = vld [vmem:[%s13 + $0x48] sm:$0xff]
    %v527 = vld [vmem:[%s13 + $0x50] sm:$0xff]
    %v528 = vld [vmem:[%s13 + $0x58] sm:$0xff]
    %v529 = vld [vmem:[%s13 + $0x60] sm:$0xff]
    %v530 = vld [vmem:[%s13 + $0x68] sm:$0xff]
    %v531 = vld [vmem:[%s13 + $0x70] sm:$0xff]
    %v532 = vld [vmem:[%s13 + $0x78] sm:$0xff]
    %v533 = vld [vmem:[%s13 + $0x80] sm:$0xff]
    %v534 = vld [vmem:[%s13 + $0x88] sm:$0xff]
    %v535 = vld [vmem:[%s13 + $0x90] sm:$0xff]
    %v536 = vld [vmem:[%s13 + $0x98] sm:$0xff]
    %v537 = vld [vmem:[%s13 + $0xa0] sm:$0xff]
    %v538 = vld [vmem:[%s13 + $0xa8] sm:$0xff]
    %v539 = vld [vmem:[%s13 + $0xb0] sm:$0xff]
    %v540 = vld [vmem:[%s13 + $0xb8] sm:$0xff]
    %v541 = vld [vmem:[%s13 + $0xc0] sm:$0xff]
    %v542 = vld [vmem:[%s13 + $0xc8] sm:$0xff]
    %v543 = vld [vmem:[%s13 + $0xd0] sm:$0xff]
    %v544 = vld [vmem:[%s13 + $0xd8] sm:$0xff]
    %v545 = vld [vmem:[%s13 + $0xe0] sm:$0xff]
    %v546 = vld [vmem:[%s13 + $0xe8] sm:$0xff]
    %v547 = vld [vmem:[%s13 + $0xf0] sm:$0xff]
    %v548 = vld [vmem:[%s13 + $0xf8] sm:$0xff]
    %v549 = vld [vmem:[%s13 + $0x100] sm:$0xff]
    %v550 = vld [vmem:[%s13 + $0x108] sm:$0xff]
    %v551 = vld [vmem:[%s13 + $0x110] sm:$0xff]
    %v552 = vld [vmem:[%s13 + $0x118] sm:$0xff]
    %v553 = vld [vmem:[%s13 + $0x120] sm:$0xff]
    %v554 = vld [vmem:[%s13 + $0x128] sm:$0xff]
    %v555 = vld [vmem:[%s13 + $0x130] sm:$0xff]
    %v556 = vld [vmem:[%s13 + $0x138] sm:$0xff]
    %v557 = vld [vmem:[%s13 + $0x140] sm:$0xff]
    %v558 = vld [vmem:[%s13 + $0x148] sm:$0xff]
    %v559 = vld [vmem:[%s13 + $0x150] sm:$0xff]
    %v560 = vld [vmem:[%s13 + $0x158] sm:$0xff]
    %v561 = vld [vmem:[%s13 + $0x160] sm:$0xff]
    %v562 = vld [vmem:[%s13 + $0x168] sm:$0xff]
    %v563 = vld [vmem:[%s13 + $0x170] sm:$0xff]
    %v564 = vld [vmem:[%s13 + $0x178] sm:$0xff]
    %v565 = vld [vmem:[%s13 + $0x180] sm:$0xff]
    %v566 = vld [vmem:[%s13 + $0x188] sm:$0xff]
    %v567 = vld [vmem:[%s13 + $0x190] sm:$0xff]
    %v568 = vld [vmem:[%s13 + $0x198] sm:$0xff]
    %v569 = vld [vmem:[%s13 + $0x1a0] sm:$0xff]
    %v570 = vld [vmem:[%s13 + $0x1a8] sm:$0xff]
    %v571 = vld [vmem:[%s13 + $0x1b0] sm:$0xff]
    %v572 = vld [vmem:[%s13 + $0x1b8] sm:$0xff]
    %v573 = vld [vmem:[%s13 + $0x1c0] sm:$0xff]
    %v574 = vld [vmem:[%s13 + $0x1c8] sm:$0xff]
    %v575 = vld [vmem:[%s13 + $0x1d0] sm:$0xff]
    %v576 = vld [vmem:[%s13 + $0x1d8] sm:$0xff]
    %v577 = vld [vmem:[%s13 + $0x1e0] sm:$0xff]
    %v578 = vld [vmem:[%s13 + $0x1e8] sm:$0xff]
    %v579 = vld [vmem:[%s13 + $0x1f0] sm:$0xff]
    %v580 = vld [vmem:[%s13 + $0x1f8] sm:$0xff]
    %v581 = vld [vmem:[%s13 + $0x200] sm:$0xff]
    %v582 = vld [vmem:[%s13 + $0x208] sm:$0xff]
    %v583 = vld [vmem:[%s13 + $0x210] sm:$0xff]
    %v584 = vld [vmem:[%s13 + $0x218] sm:$0xff]
    %v585 = vld [vmem:[%s13 + $0x220] sm:$0xff]
    %v586 = vld [vmem:[%s13 + $0x228] sm:$0xff]
    %v587 = vld [vmem:[%s13 + $0x230] sm:$0xff]
    %v588 = vld [vmem:[%s13 + $0x238] sm:$0xff]
    %v589 = vld [vmem:[%s13 + $0x240] sm:$0xff]
    %v590 = vld [vmem:[%s13 + $0x248] sm:$0xff]
    %v591 = vld [vmem:[%s13 + $0x250] sm:$0xff]
    %v592 = vld [vmem:[%s13 + $0x258] sm:$0xff]
    %v593 = vld [vmem:[%s13 + $0x260] sm:$0xff]
    %v594 = vld [vmem:[%s13 + $0x268] sm:$0xff]
    %v595 = vld [vmem:[%s13 + $0x270] sm:$0xff]
    %v596 = vld [vmem:[%s13 + $0x278] sm:$0xff]
    %v597 = vld [vmem:[%s13 + $0x280] sm:$0xff]
    %v598 = vld [vmem:[%s13 + $0x288] sm:$0xff]
    %v599 = vld [vmem:[%s13 + $0x290] sm:$0xff]
    %v600 = vld [vmem:[%s13 + $0x298] sm:$0xff]
    %v601 = vld [vmem:[%s13 + $0x2a0] sm:$0xff]
    %v602 = vld [vmem:[%s13 + $0x2a8] sm:$0xff]
    %v603 = vld [vmem:[%s13 + $0x2b0] sm:$0xff]
    %v604 = vld [vmem:[%s13 + $0x2b8] sm:$0xff]
    %v605 = vld [vmem:[%s13 + $0x2c0] sm:$0xff]
    %v606 = vld [vmem:[%s13 + $0x2c8] sm:$0xff]
    %v607 = vld [vmem:[%s13 + $0x2d0] sm:$0xff]
    %v608 = vld [vmem:[%s13 + $0x2d8] sm:$0xff]
    %v609 = vld [vmem:[%s13 + $0x2e0] sm:$0xff]
    %v610 = vld [vmem:[%s13 + $0x2e8] sm:$0xff]
    %v611 = vld [vmem:[%s13 + $0x2f0] sm:$0xff]
    %v612 = vld [vmem:[%s13 + $0x2f8] sm:$0xff]
    %v613 = vld [vmem:[%s13 + $0x300] sm:$0xff]
    %v614 = vld [vmem:[%s13 + $0x308] sm:$0xff]
    %v615 = vld [vmem:[%s13 + $0x310] sm:$0xff]
    %v616 = vld [vmem:[%s13 + $0x318] sm:$0xff]
    %v617 = vld [vmem:[%s13 + $0x320] sm:$0xff]
    %v618 = vld [vmem:[%s13 + $0x328] sm:$0xff]
    %v619 = vld [vmem:[%s13 + $0x330] sm:$0xff]
    %v620 = vld [vmem:[%s13 + $0x338] sm:$0xff]
    %v621 = vld [vmem:[%s13 + $0x340] sm:$0xff]
    %v622 = vld [vmem:[%s13 + $0x348] sm:$0xff]
    %v623 = vld [vmem:[%s13 + $0x350] sm:$0xff]
    %v624 = vld [vmem:[%s13 + $0x358] sm:$0xff]
    %v625 = vld [vmem:[%s13 + $0x360] sm:$0xff]
    %v626 = vld [vmem:[%s13 + $0x368] sm:$0xff]
    %v627 = vld [vmem:[%s13 + $0x370] sm:$0xff]
    %v628 = vld [vmem:[%s13 + $0x378] sm:$0xff]
    %v629 = vld [vmem:[%s14] sm:$0x7f]
    %v631 = vperm.slane %v629, 0
    %v632 = vperm.slane %v629, 1
    %v633 = vperm.slane %v629, 2
    %v634 = vperm.slane %v629, 3
    %v635 = vperm.slane %v629, 4
    %v636 = vperm.slane %v629, 5
    %v637 = vperm.slane %v629, 6
    %645 = vmatpush.msra.mxu0 %v622
    %646 = vmatpush.msra.mxu0 %v615
    %647 = vmatpush.msra.mxu0 %v608
    %648 = vmatpush.msra.mxu0 %v601
    %649 = vmatpush.msra.mxu0 %v594
    %650 = vmatpush.msra.mxu0 %v587
    %651 = vmatpush.msra.mxu0 %v580
    %652 = vmatpush.msra.mxu0 %v573
    %653 = vmatpush.msra.mxu0 %v566
    %654 = vmatpush.msra.mxu0 %v559
    %655 = vmatpush.msra.mxu0 %v552
    %656 = vmatpush.msra.mxu0 %v545
    %657 = vmatpush.msra.mxu0 %v538
    %658 = vmatpush.msra.mxu0 %v531
    %659 = vmatpush.msra.mxu0 %v524
    %660 = vmatpush.msra.mxu0 %v517
    %661 = vmatmul.f32.gmra.mxu0 %v516
    %v662 = vpop.f32.mrf.mxu0
    %v663 = vadd.f32 %v631, %v662
    %664 = vdwg.mxu0
    %665 = vmatpush.msra.mxu0 %v623
    %666 = vmatpush.msra.mxu0 %v616
    %667 = vmatpush.msra.mxu0 %v609
    %668 = vmatpush.msra.mxu0 %v602
    %669 = vmatpush.msra.mxu0 %v595
    %670 = vmatpush.msra.mxu0 %v588
    %671 = vmatpush.msra.mxu0 %v581
    %672 = vmatpush.msra.mxu0 %v574
    %673 = vmatpush.msra.mxu0 %v567
    %674 = vmatpush.msra.mxu0 %v560
    %675 = vmatpush.msra.mxu0 %v553
    %676 = vmatpush.msra.mxu0 %v546
    %677 = vmatpush.msra.mxu0 %v539
    %678 = vmatpush.msra.mxu0 %v532
    %679 = vmatpush.msra.mxu0 %v525
    %680 = vmatpush.msra.mxu0 %v518
    %681 = vmatmul.f32.gmra.mxu0 %v516
    %v682 = vpop.f32.mrf.mxu0
    %v683 = vadd.f32 %v632, %v682
    %684 = vdwg.mxu0
    %685 = vmatpush.msra.mxu0 %v624
    %686 = vmatpush.msra.mxu0 %v617
    %687 = vmatpush.msra.mxu0 %v610
    %688 = vmatpush.msra.mxu0 %v603
    %689 = vmatpush.msra.mxu0 %v596
    %690 = vmatpush.msra.mxu0 %v589
    %691 = vmatpush.msra.mxu0 %v582
    %692 = vmatpush.msra.mxu0 %v575
    %693 = vmatpush.msra.mxu0 %v568
    %694 = vmatpush.msra.mxu0 %v561
    %695 = vmatpush.msra.mxu0 %v554
    %696 = vmatpush.msra.mxu0 %v547
    %697 = vmatpush.msra.mxu0 %v540
    %698 = vmatpush.msra.mxu0 %v533
    %699 = vmatpush.msra.mxu0 %v526
    %700 = vmatpush.msra.mxu0 %v519
    %701 = vmatmul.f32.gmra.mxu0 %v516
    %v702 = vpop.f32.mrf.mxu0
    %v703 = vadd.f32 %v633, %v702
    %704 = vdwg.mxu0
    %705 = vmatpush.msra.mxu0 %v625
    %706 = vmatpush.msra.mxu0 %v618
    %707 = vmatpush.msra.mxu0 %v611
    %708 = vmatpush.msra.mxu0 %v604
    %709 = vmatpush.msra.mxu0 %v597
    %710 = vmatpush.msra.mxu0 %v590
    %711 = vmatpush.msra.mxu0 %v583
    %712 = vmatpush.msra.mxu0 %v576
    %713 = vmatpush.msra.mxu0 %v569
    %714 = vmatpush.msra.mxu0 %v562
    %715 = vmatpush.msra.mxu0 %v555
    %716 = vmatpush.msra.mxu0 %v548
    %717 = vmatpush.msra.mxu0 %v541
    %718 = vmatpush.msra.mxu0 %v534
    %719 = vmatpush.msra.mxu0 %v527
    %720 = vmatpush.msra.mxu0 %v520
    %721 = vmatmul.f32.gmra.mxu0 %v516
    %v722 = vpop.f32.mrf.mxu0
    %v723 = vadd.f32 %v634, %v722
    %724 = vdwg.mxu0
    %725 = vmatpush.msra.mxu0 %v626
    %726 = vmatpush.msra.mxu0 %v619
    %727 = vmatpush.msra.mxu0 %v612
    %728 = vmatpush.msra.mxu0 %v605
    %729 = vmatpush.msra.mxu0 %v598
    %730 = vmatpush.msra.mxu0 %v591
    %731 = vmatpush.msra.mxu0 %v584
    %732 = vmatpush.msra.mxu0 %v577
    %733 = vmatpush.msra.mxu0 %v570
    %734 = vmatpush.msra.mxu0 %v563
    %735 = vmatpush.msra.mxu0 %v556
    %736 = vmatpush.msra.mxu0 %v549
    %737 = vmatpush.msra.mxu0 %v542
    %738 = vmatpush.msra.mxu0 %v535
    %739 = vmatpush.msra.mxu0 %v528
    %740 = vmatpush.msra.mxu0 %v521
    %741 = vmatmul.f32.gmra.mxu0 %v516
    %v742 = vpop.f32.mrf.mxu0
    %v743 = vadd.f32 %v635, %v742
    %744 = vdwg.mxu0
    %745 = vmatpush.msra.mxu0 %v627
    %746 = vmatpush.msra.mxu0 %v620
    %747 = vmatpush.msra.mxu0 %v613
    %748 = vmatpush.msra.mxu0 %v606
    %749 = vmatpush.msra.mxu0 %v599
    %750 = vmatpush.msra.mxu0 %v592
    %751 = vmatpush.msra.mxu0 %v585
    %752 = vmatpush.msra.mxu0 %v578
    %753 = vmatpush.msra.mxu0 %v571
    %754 = vmatpush.msra.mxu0 %v564
    %755 = vmatpush.msra.mxu0 %v557
    %756 = vmatpush.msra.mxu0 %v550
    %757 = vmatpush.msra.mxu0 %v543
    %758 = vmatpush.msra.mxu0 %v536
    %759 = vmatpush.msra.mxu0 %v529
    %760 = vmatpush.msra.mxu0 %v522
    %761 = vmatmul.f32.gmra.mxu0 %v516
    %v762 = vpop.f32.mrf.mxu0
    %v763 = vadd.f32 %v636, %v762
    %764 = vdwg.mxu0
    %765 = vmatpush.msra.mxu0 %v628
    %766 = vmatpush.msra.mxu0 %v621
    %767 = vmatpush.msra.mxu0 %v614
    %768 = vmatpush.msra.mxu0 %v607
    %769 = vmatpush.msra.mxu0 %v600
    %770 = vmatpush.msra.mxu0 %v593
    %771 = vmatpush.msra.mxu0 %v586
    %772 = vmatpush.msra.mxu0 %v579
    %773 = vmatpush.msra.mxu0 %v572
    %774 = vmatpush.msra.mxu0 %v565
    %775 = vmatpush.msra.mxu0 %v558
    %776 = vmatpush.msra.mxu0 %v551
    %777 = vmatpush.msra.mxu0 %v544
    %778 = vmatpush.msra.mxu0 %v537
    %779 = vmatpush.msra.mxu0 %v530
    %780 = vmatpush.msra.mxu0 %v523
    %781 = vmatmul.f32.gmra.mxu0 %v516
    %v782 = vpop.f32.mrf.mxu0
    %v783 = vadd.f32 %v637, %v782
    %784 = vdwg.mxu0
    %785 = vst [vmem:[#allocation2] sm:$0xff] %v663
    %786 = vst [vmem:[#allocation2 + $0x8] sm:$0xff] %v683
    %787 = vst [vmem:[#allocation2 + $0x10] sm:$0xff] %v703
    %788 = vst [vmem:[#allocation2 + $0x18] sm:$0xff] %v723
    %789 = vst [vmem:[#allocation2 + $0x20] sm:$0xff] %v743
    %790 = vst [vmem:[#allocation2 + $0x28] sm:$0xff] %v763
    %791 = vst.msk [vmem:[#allocation2 + $0x30] sm:$0xff] %vm160, %v783
    // Predicated region
    $region62: #{tpu_custom_call.1} parent=1 // pred_check
      _
    $region63: #{tpu_custom_call.1} parent=1 // pred_check_branch
      %793 = sbr.rel (0) target = $region65
    $region64: #{tpu_custom_call.1} parent=1 // pred_region
      %795 = vsyncadd [#allocation3], 0
      %s797 = sshll.u32 [#allocation2], 4
      %s798 = int_to_ptr.vmem [resolvable:$true] %s797
      %s799 = sshll.u32 %s15, 4
      %s800 = int_to_ptr.hbm [resolvable:$true] %s799
      %802 = dma.vmem_to_hbm [thread:$0]  %s798, 896, %s800, [#allocation3]
    $region65: #{tpu_custom_call.1} parent=1 // pred_fallthru
      _
    // Predicated region
    $region66: #{tpu_custom_call.1} parent=1 // pred_check
      _
    $region67: #{tpu_custom_call.1} parent=1 // pred_check_branch
      %804 = sbr.rel (0) target = $region69
    $region68: #{tpu_custom_call.1} parent=1 // pred_region
      %806 = dma.done [#allocation3], 896
    $region69: #{tpu_custom_call.1} parent=1 // pred_fallthru
      _
    %807 = vsyncpa [#allocation3], 1

</llo_original>
